<compile_context>
chip_gen: v7x
topology: tpu7x:2x2x1
jax: 0.10.0
libtpu: 0.0.40
codegen_flags: <defaults>
</compile_context>

<pallas_src>
import functools

import jax
import jax.numpy as jnp
from jax import lax
from jax.experimental import pallas as pl
from jax.experimental.pallas import tpu as pltpu


def _cdiv(a, b):
    return -(-a // b)


def _round_up(n, m):
    return ((n + m - 1) // m) * m


# ---------------------------------------------------------------------------
# Kernels
# ---------------------------------------------------------------------------
def _accumulate_tile(x_ref, acc_ref, tile_idx, *, l_tile, seq_len, may_mask):
    """acc += sum over the sequence axis of the current x tile (f32 accumulate).

    `tile_idx` is the global, *unclamped* L-tile index.  Rows at global
    positions >= seq_len (partial last tile, or fully-dummy tiles in the split
    path) are zeroed before accumulating.  Full tiles take a select-free fast
    path so the hot loop stays at ~1 VPU add per streamed element.
    """

    def _full_sum():
        return jnp.sum(x_ref[...].astype(jnp.float32), axis=1)

    if not may_mask:
        acc_ref[...] += _full_sum()
        return

    n_full = seq_len // l_tile  # static: number of guaranteed-full tiles

    @pl.when(tile_idx < n_full)
    def _():
        acc_ref[...] += _full_sum()

    @pl.when(tile_idx >= n_full)
    def _():
        # Valid rows in this tile; <= 0 for dummy tiles (-> everything masked).
        valid = seq_len - tile_idx * l_tile
        row = lax.broadcasted_iota(jnp.int32, (1, l_tile, 1), 1)
        xm = jnp.where(row < valid, x_ref[...].astype(jnp.float32), 0.0)
        acc_ref[...] += jnp.sum(xm, axis=1)


def _gating_fused_kernel(x_ref, w_ref, b_ref, o_ref, acc_ref, *,
                         l_tile, seq_len, may_mask, inv_len):
    # x_ref:   (b_tile, l_tile, D)  streamed activation tile
    # w_ref:   (D, Gp)              resident weight (constant index -> fetched once)
    # b_ref:   (1, Gp)              resident bias
    # o_ref:   (b_tile, Gp)         output block (revisited across the L axis)
    # acc_ref: (b_tile, D) f32      running sum over the sequence
    li = pl.program_id(1)

    @pl.when(li == 0)
    def _():
        acc_ref[...] = jnp.zeros_like(acc_ref)

    _accumulate_tile(x_ref, acc_ref, li, l_tile=l_tile, seq_len=seq_len,
                     may_mask=may_mask)

    @pl.when(li == pl.num_programs(1) - 1)
    def _():
        # Finish the mean and the Linear head entirely in f32.  This is one
        # tiny (b_tile, D) x (D, Gp) MXU matmul per batch tile — negligible —
        # so no precision is traded away (per review).
        pooled = acc_ref[...] * inv_len
        logits = jnp.dot(pooled, w_ref[...].astype(jnp.float32),
                         preferred_element_type=jnp.float32)
        o_ref[...] = (logits + b_ref[...].astype(jnp.float32)).astype(o_ref.dtype)


def _gating_pool_kernel(x_ref, o_ref, *, l_tile, seq_len, tiles_per_split,
                        may_mask):
    # Split-L path (small batch): x_ref: (B, l_tile, D) streamed tile;
    # o_ref: (1, B, D) f32 partial sums, one resident block per L-split,
    # accumulated in place across that split's (arbitrary) tile axis.
    si = pl.program_id(0)
    lj = pl.program_id(1)

    @pl.when(lj == 0)
    def _():
        o_ref[...] = jnp.zeros_like(o_ref)

    _accumulate_tile(x_ref, o_ref.at[0], si * tiles_per_split + lj,
                     l_tile=l_tile, seq_len=seq_len, may_mask=may_mask)


# ---------------------------------------------------------------------------
# Wrapper
# ---------------------------------------------------------------------------
def gating_function(x, w, b, *, max_x_tile_bytes=None):
    """Forward pass of GatingFunction: mean over the sequence dim, then Linear.

    x: (B, L, D) activations (f32 or bf16)
    w: (G, D)    nn.Linear weight layout
    b: (G,)      bias
    returns (B, G) in x.dtype.  `max_x_tile_bytes` optionally caps the per-buffer
    x tile size (used by the tests to force multi-tile / split code paths).
    """
    B, L, D = x.shape
    G = w.shape[0]
    x_item = jnp.dtype(x.dtype).itemsize
    w_item = jnp.dtype(w.dtype).itemsize
    inv_len = 1.0 / float(L)

    # nn.Linear stores the weight as (G, D); transpose once (G*D elements,
    # negligible) so the in-kernel contraction is a plain row-major dot.
    # num_gates is zero-padded to a multiple of 128 for full-lane weight
    # columns / output stores (tiny arrays — x itself is never padded/copied).
    Gp = _round_up(G, 128)
    w_t = jnp.pad(jnp.transpose(w), ((0, 0), (0, Gp - G)))   # (D, Gp)
    bias2 = jnp.pad(b.reshape(1, G), ((0, 0), (0, Gp - G)))  # (1, Gp)

    # --- batch tiling -------------------------------------------------------
    b_tile = B if B <= 8 else 8
    n_bsteps = _cdiv(B, b_tile)
    B_out = n_bsteps * b_tile          # pad only the tiny output, never x

    # --- generation-aware VMEM / tile budget --------------------------------
    try:
        vmem_cap = int(pltpu.get_tpu_info().vmem_capacity_bytes)
    except Exception:                  # conservative fallback (v7x-sized)
        vmem_cap = 64 * 1024 * 1024
    budget = (vmem_cap * 3) // 4       # ~48 MiB on v7x, ~96 MiB on v5e/v6e

    lane_d = _round_up(D, 128)         # VMEM lane padding for narrow d_model
    fixed = (2 * _round_up(D, 8) * Gp * w_item          # weight (2 buffers)
             + 2 * 8 * Gp * w_item                      # bias
             + 2 * _round_up(b_tile, 8) * Gp * x_item   # output blocks
             + _round_up(b_tile, 8) * lane_d * 4        # f32 accumulator
             + (2 << 20))                               # Mosaic internal slack
    per_buf_cap = (16 << 20) if vmem_cap <= (96 << 20) else (32 << 20)
    if max_x_tile_bytes is not None:
        per_buf_cap = min(per_buf_cap, int(max_x_tile_bytes))
    per_buf = min(per_buf_cap, max(budget - fixed, 1 << 20) // 2)

    row_bytes = b_tile * lane_d * x_item          # VMEM bytes per L row in a tile
    l_cap = max(8, (per_buf // max(row_bytes, 1)) // 8 * 8)
    n_min = 1 if l_cap >= L else _cdiv(L, l_cap)

    # v7x shards the *parallel* grid axes across its 2 TensorCores.  If the
    # batch axis has a single step (B <= 8) but the sequence needs >= 2 tiles,
    # split the L reduction over a leading parallel axis so both cores stream
    # half the sequence (harmless on single-core v5e/v6e).
    use_split = (n_bsteps == 1) and (n_min >= 2)

    if use_split:
        n_split = 2
        tiles_per_split = _cdiv(n_min, n_split)
        l_tile = min(l_cap, _round_up(_cdiv(L, n_split * tiles_per_split), 8))
        n_ltiles = _cdiv(L, l_tile)
    else:
        n_split = 1
        l_tile = L if l_cap >= L else l_cap
        n_ltiles = _cdiv(L, l_tile)
        tiles_per_split = n_ltiles

    # Masking needed if the last tile is partial, or (split path) the grid has
    # a dummy step (its index_map is clamped to the previous step's tile so the
    # DMA is skipped; its contribution is masked to zero).
    may_mask = (L % l_tile != 0) or (n_split * tiles_per_split != n_ltiles)

    x_tile_vmem = b_tile * _round_up(l_tile, 8) * lane_d * x_item
    vmem_limit = int(max(16 << 20,
                         min(vmem_cap - (2 << 20),
                             fixed + 2 * x_tile_vmem + (2 << 20))))

    cost = pl.CostEstimate(
        flops=int(B * L * D + 2 * B * D * G),
        transcendentals=0,
        bytes_accessed=int(x.size * x_item + w.size * w_item + B * G * x_item),
    )

    if not use_split:
        kernel = functools.partial(
            _gating_fused_kernel, l_tile=l_tile, seq_len=L,
            may_mask=may_mask, inv_len=inv_len)
        out = pl.pallas_call(
            kernel,
            out_shape=jax.ShapeDtypeStruct((B_out, Gp), x.dtype),
            grid_spec=pltpu.PrefetchScalarGridSpec(
                num_scalar_prefetch=0,
                grid=(n_bsteps, n_ltiles),
                in_specs=[
                    pl.BlockSpec((b_tile, l_tile, D), lambda bi, li: (bi, li, 0)),
                    pl.BlockSpec((D, Gp), lambda bi, li: (0, 0)),
                    pl.BlockSpec((1, Gp), lambda bi, li: (0, 0)),
                ],
                out_specs=pl.BlockSpec((b_tile, Gp), lambda bi, li: (bi, 0)),
                scratch_shapes=[pltpu.VMEM((b_tile, D), jnp.float32)],
            ),
            compiler_params=pltpu.CompilerParams(
                dimension_semantics=("parallel", "arbitrary"),
                vmem_limit_bytes=vmem_limit,
            ),
            cost_estimate=cost,
        )(x, w_t, bias2)
        return out[:B, :G]

    # ---- split-L path (B <= 8, long sequence) ------------------------------
    tps = tiles_per_split
    last_tile = n_ltiles - 1
    kernel = functools.partial(
        _gating_pool_kernel, l_tile=l_tile, seq_len=L,
        tiles_per_split=tps, may_mask=may_mask)
    partial_sums = pl.pallas_call(
        kernel,
        out_shape=jax.ShapeDtypeStruct((n_split, B, D), jnp.float32),
        grid_spec=pltpu.PrefetchScalarGridSpec(
            num_scalar_prefetch=0,
            grid=(n_split, tps),
            in_specs=[
                pl.BlockSpec(
                    (b_tile, l_tile, D),
                    lambda si, lj: (0, jnp.minimum(si * tps + lj, last_tile), 0)),
            ],
            out_specs=pl.BlockSpec((1, B, D), lambda si, lj: (si, 0, 0)),
        ),
        compiler_params=pltpu.CompilerParams(
            dimension_semantics=("parallel", "arbitrary"),
            vmem_limit_bytes=vmem_limit,
        ),
        cost_estimate=cost,
    )(x)

    # Tiny f32 epilogue (O(B*D*G) flops on a few-KiB tensor), as suggested by
    # the review; fusing it into the streaming kernel would serialize the two
    # parallel L-splits.
    pooled = jnp.sum(partial_sums, axis=0) * inv_len           # (B, D) f32
    logits = pooled @ w.astype(jnp.float32).T + b.astype(jnp.float32)[None, :]
    return logits.astype(x.dtype)


# ---------------------------------------------------------------------------
# Tests
# ---------------------------------------------------------------------------
if __name__ == "__main__":
    def ref_fn(x, w, b):
        xf = x.astype(jnp.float32)
        return jnp.mean(xf, axis=1) @ w.astype(jnp.float32).T + b.astype(jnp.float32)

    key = jax.random.PRNGKey(0)

    # 1) Module-default d_model=256, num_gates_cls=5; small batch / seq.
    B, L, D, G = 2, 8, 256, 5
    k1, k2, key = jax.random.split(key, 3)
    x = jax.random.normal(k1, (B, L, D), dtype=jnp.float32)
    bound = 1.0 / jnp.sqrt(jnp.float32(D))
    w = jax.random.uniform(k2, (G, D), dtype=jnp.float32, minval=-bound, maxval=bound)
    b = jnp.zeros((G,), dtype=jnp.float32)   # nn.init.constant_(self.head.bias, 0)
    out = jax.block_until_ready(gating_function(x, w, b))
    assert out.shape == (B, G)
    assert jnp.allclose(out, ref_fn(x, w, b), atol=1e-4, rtol=1e-4)

    # 2) Unaligned batch & sequence -> partial last B block + masked last L
    #    tile on the fused path (small tile bytes force several L tiles).
    B2, L2, D2 = 11, 37, 64
    k1, k2, key = jax.random.split(key, 3)
    x2 = jax.random.normal(k1, (B2, L2, D2), dtype=jnp.float32)
    w2 = jax.random.uniform(k2, (G, D2), dtype=jnp.float32, minval=-0.1, maxval=0.1)
    bias_t = jax.random.uniform(jax.random.PRNGKey(7), (G,), dtype=jnp.float32)
    out2 = jax.block_until_ready(
        gating_function(x2, w2, bias_t, max_x_tile_bytes=64 * 1024))
    assert out2.shape == (B2, G)
    assert jnp.allclose(out2, ref_fn(x2, w2, bias_t), atol=1e-4, rtol=1e-4)

    # 3) Small batch / longer sequence -> split-L (dual-core) path with an L
    #    remainder in the last tile.
    B3, L3, D3 = 2, 170, 128
    k1, k2, key = jax.random.split(key, 3)
    x3 = jax.random.normal(k1, (B3, L3, D3), dtype=jnp.float32)
    w3 = jax.random.uniform(k2, (G, D3), dtype=jnp.float32, minval=-0.1, maxval=0.1)
    out3 = jax.block_until_ready(
        gating_function(x3, w3, b, max_x_tile_bytes=64 * 1024))
    assert jnp.allclose(out3, ref_fn(x3, w3, b), atol=1e-4, rtol=1e-4)

    # 4) Split path with an odd tile count (exercises the clamped dummy step).
    B4, L4, D4 = 2, 33, 128
    k1, key = jax.random.split(key)
    x4 = jax.random.normal(k1, (B4, L4, D4), dtype=jnp.float32)
    out4 = jax.block_until_ready(
        gating_function(x4, w3, b, max_x_tile_bytes=16 * 1024))
    assert jnp.allclose(out4, ref_fn(x4, w3, b), atol=1e-4, rtol=1e-4)

    # 5) bf16 activations/weights (f32 in-kernel accumulation + f32 finalize).
    xb = x.astype(jnp.bfloat16)
    wb = w.astype(jnp.bfloat16)
    outb = jax.block_until_ready(gating_function(xb, wb, b.astype(jnp.bfloat16)))
    assert outb.shape == (B, G)
    assert jnp.allclose(outb.astype(jnp.float32), ref_fn(xb, wb, b),
                        atol=2e-2, rtol=2e-2)

    print("KERNEL_OK")
</pallas_src>

<mosaic_0001>
module attributes {stable_mosaic.version = 11 : i64} {
  func.func @_gating_fused_kernel(%arg0: i32, %arg1: i32, %arg2: memref<2x8x256xf32, #tpu.memory_space<vmem>>, %arg3: memref<256x128xf32, #tpu.memory_space<vmem>>, %arg4: memref<1x128xf32, #tpu.memory_space<vmem>>, %arg5: memref<2x128xf32, #tpu.memory_space<vmem>>, %arg6: memref<2x256xf32, #tpu.memory_space<vmem>>) attributes {dimension_semantics = [#tpu.dimension_semantics<parallel>, #tpu.dimension_semantics<arbitrary>], iteration_bounds = array<i64: 1, 1>, scalar_prefetch = 0 : i64, scratch_operands = 1 : i64, tpu.core_type = #tpu.core_type<tc>, window_params = [{transform_indices = @transform_0, window_bounds = array<i64: 2, 8, 256>}, {pipeline_mode = #tpu.pipeline_mode<synchronous>, transform_indices = @transform_1, window_bounds = array<i64: 256, 128>}, {pipeline_mode = #tpu.pipeline_mode<synchronous>, transform_indices = @transform_2, window_bounds = array<i64: 1, 128>}, {transform_indices = @transform_3, window_bounds = array<i64: 2, 128>}]} {
    %c0_i32 = arith.constant 0 : i32
    %0 = arith.cmpi eq, %arg1, %c0_i32 : i32
    %1 = arith.extui %0 : i1 to i32
    %c0_i32_0 = arith.constant 0 : i32
    %2 = arith.cmpi ne, %1, %c0_i32_0 : i32
    scf.if %2 {
      %cst_9 = arith.constant 0.000000e+00 : f32
      %11 = vector.broadcast %cst_9 : f32 to vector<2x256xf32>
      %c0_10 = arith.constant 0 : index
      %c0_11 = arith.constant 0 : index
      %12 = vector.load %arg6[%c0_10, %c0_11] : memref<2x256xf32, #tpu.memory_space<vmem>>, vector<2x256xf32>
      tpu.vector_store %arg6[%c0_10, %c0_11], %11 {strides = array<i32>} : memref<2x256xf32, #tpu.memory_space<vmem>>, vector<2x256xf32>,
    } else {
    }
    %c0 = arith.constant 0 : index
    %c0_1 = arith.constant 0 : index
    %3 = vector.load %arg6[%c0, %c0_1] : memref<2x256xf32, #tpu.memory_space<vmem>>, vector<2x256xf32>
    %c0_2 = arith.constant 0 : index
    %c0_3 = arith.constant 0 : index
    %c0_4 = arith.constant 0 : index
    %4 = vector.load %arg2[%c0_2, %c0_3, %c0_4] : memref<2x8x256xf32, #tpu.memory_space<vmem>>, vector<2x8x256xf32>
    %cst = arith.constant dense<0.000000e+00> : vector<2x256xf32>
    %5 = vector.multi_reduction <add>, %4, %cst [1] : vector<2x8x256xf32> to vector<2x256xf32>
    %6 = arith.addf %3, %5 : vector<2x256xf32>
    %c0_5 = arith.constant 0 : index
    %c0_6 = arith.constant 0 : index
    %7 = vector.load %arg6[%c0_5, %c0_6] : memref<2x256xf32, #tpu.memory_space<vmem>>, vector<2x256xf32>
    tpu.vector_store %arg6[%c0_5, %c0_6], %6 {strides = array<i32>} : memref<2x256xf32, #tpu.memory_space<vmem>>, vector<2x256xf32>,
    %c0_i32_7 = arith.constant 0 : i32
    %8 = arith.cmpi eq, %arg1, %c0_i32_7 : i32
    %9 = arith.extui %8 : i1 to i32
    %c0_i32_8 = arith.constant 0 : i32
    %10 = arith.cmpi ne, %9, %c0_i32_8 : i32
    scf.if %10 {
      %c0_9 = arith.constant 0 : index
      %c0_10 = arith.constant 0 : index
      %11 = vector.load %arg6[%c0_9, %c0_10] : memref<2x256xf32, #tpu.memory_space<vmem>>, vector<2x256xf32>
      %cst_11 = arith.constant 1.250000e-01 : f32
      %12 = vector.broadcast %cst_11 : f32 to vector<2x256xf32>
      %13 = arith.mulf %11, %12 : vector<2x256xf32>
      %c0_12 = arith.constant 0 : index
      %c0_13 = arith.constant 0 : index
      %14 = vector.load %arg3[%c0_12, %c0_13] : memref<256x128xf32, #tpu.memory_space<vmem>>, vector<256x128xf32>
      %cst_14 = arith.constant dense<0.000000e+00> : vector<2x128xf32>
      %15 = tpu.matmul %13, %14, %cst_14 {dimension_numbers = #tpu.dot_dimension_numbers<[1], [0], [0], [1], [0, 0, 1, 1], [], []>} : vector<2x256xf32>, vector<256x128xf32>, vector<2x128xf32> -> vector<2x128xf32>
      %c0_15 = arith.constant 0 : index
      %c0_16 = arith.constant 0 : index
      %16 = vector.load %arg4[%c0_15, %c0_16] : memref<1x128xf32, #tpu.memory_space<vmem>>, vector<1x128xf32>
      %17 = vector.broadcast %16 : vector<1x128xf32> to vector<2x128xf32>
      %18 = arith.addf %15, %17 : vector<2x128xf32>
      %c0_17 = arith.constant 0 : index
      %c0_18 = arith.constant 0 : index
      %19 = vector.load %arg5[%c0_17, %c0_18] : memref<2x128xf32, #tpu.memory_space<vmem>>, vector<2x128xf32>
      tpu.vector_store %arg5[%c0_17, %c0_18], %18 {strides = array<i32>} : memref<2x128xf32, #tpu.memory_space<vmem>>, vector<2x128xf32>,
    } else {
    }
    return
  }
  func.func @transform_0(%arg0: i32, %arg1: i32) -> (i32, i32, i32) {
    %c0_i32 = arith.constant 0 : i32
    %c0_i32_0 = arith.constant 0 : i32
    return %arg0, %arg1, %c0_i32 : i32, i32, i32
  }
  func.func @transform_1(%arg0: i32, %arg1: i32) -> (i32, i32) {
    %c0_i32 = arith.constant 0 : i32
    %c0_i32_0 = arith.constant 0 : i32
    %c0_i32_1 = arith.constant 0 : i32
    return %c0_i32, %c0_i32_0 : i32, i32
  }
  func.func @transform_2(%arg0: i32, %arg1: i32) -> (i32, i32) {
    %c0_i32 = arith.constant 0 : i32
    %c0_i32_0 = arith.constant 0 : i32
    %c0_i32_1 = arith.constant 0 : i32
    return %c0_i32, %c0_i32_0 : i32, i32
  }
  func.func @transform_3(%arg0: i32, %arg1: i32) -> (i32, i32) {
    %c0_i32 = arith.constant 0 : i32
    %c0_i32_0 = arith.constant 0 : i32
    return %arg0, %c0_i32 : i32, i32
  }
}

</mosaic_0001>

<llo_original>
// kernel: tpu_custom_call.1
$region0: #{tpu_custom_call.1}
  #allocation0 [shape = 'u32[]', space=smem, size = 0x4, offset = 0x4, fixed_abs, tag = 'smem constant byte address 0x4 - core index']
  #allocation1 [shape = 'u32[144,128]{1,0:T(1,128)}', space=vmem, size = 0x12000, scoped, tag = 'internal scratch']
  #allocation2 [shape = 'f32[2,256]{1,0:T(2,128)}', space=vmem, size = 0x800, scoped, tag = 'scratch operand']
  %s0 = inlined_call_operand.hbm [shape: f32[2,8,256], index: 0, kind: input, shape index: {}]
  %s1 = inlined_call_operand.hbm [shape: f32[256,128], index: 1, kind: input, shape index: {}]
  %s2 = inlined_call_operand.vmem [shape: f32[1,128], index: 2, kind: input, shape index: {}]
  %s3 = inlined_call_operand.hbm [shape: f32[2,128], index: 3, kind: output, shape index: {}]
  %s4 = sld [smem:[#allocation0]]
  $region38: #{tpu_custom_call.1} parent=0
    _
  %s6 = ssub.s32 1, %s4
  %s7 = scalar_select 0, %s6, %s4
  $region1: #{tpu_custom_call.1} parent=0
    #allocation3 [shape = 'u8[16384]{0}', space=vmem, size = 0x4000, scoped, tag = 'input window, operand 0, single buffered']
    #allocation4 [shape = 's32[1]{0}', space=sflag, size = 0x4, scoped, tag = 'scoped memory for tpu_custom_call.1']
    #allocation5 [shape = 's32[1]{0}', space=sflag, size = 0x4, scoped, tag = 'scoped memory for tpu_custom_call.1']
    #allocation6 [shape = 'u8[131072]{0}', space=vmem, size = 0x20000, scoped, tag = 'input window, operand 1, single buffered']
    #allocation7 [shape = 's32[1]{0}', space=sflag, size = 0x4, scoped, tag = 'scoped memory for tpu_custom_call.1']
    #allocation8 [shape = 'u8[1024]{0}', space=vmem, size = 0x400, scoped, tag = 'output window, operand 0, single buffered']
    %8 = vsyncpa [#allocation4], 0
    %9 = vsyncpa [#allocation7], 0
    %10 = vsyncpa [#allocation5], 0
    // Predicated region
    $region2: #{tpu_custom_call.1} parent=1 // pred_check
      _
    $region3: #{tpu_custom_call.1} parent=1 // pred_check_branch
      %12 = sbr.rel (0) target = $region5
    $region4: #{tpu_custom_call.1} parent=1 // pred_region
      %s14 = ssub.s32 512, 512
      %15 = vsyncadd [#allocation4], %s14
      %s16 = sshll.u32 [#allocation3], 4
      %s17 = int_to_ptr.vmem [resolvable:$true] %s16
      %22 = dma.hbm_to_vmem [thread:$0]  %s0, 512, %s17, [#allocation4], 256, 256, 16
    $region5: #{tpu_custom_call.1} parent=1 // pred_fallthru
      _
    // Predicated region
    $region6: #{tpu_custom_call.1} parent=1 // pred_check
      _
    $region7: #{tpu_custom_call.1} parent=1 // pred_check_branch
      %24 = sbr.rel (0) target = $region9
    $region8: #{tpu_custom_call.1} parent=1 // pred_region
      %s26 = ssub.s32 4096, 4096
      %27 = vsyncadd [#allocation7], %s26
      %s28 = sshll.u32 [#allocation6], 4
      %s29 = int_to_ptr.vmem [resolvable:$true] %s28
      %34 = dma.hbm_to_vmem [thread:$0]  %s1, 4096, %s29, [#allocation7], 128, 128, 8
    $region9: #{tpu_custom_call.1} parent=1 // pred_fallthru
      _
    // Predicated region
    $region10: #{tpu_custom_call.1} parent=1 // pred_check
      _
    $region11: #{tpu_custom_call.1} parent=1 // pred_check_branch
      %36 = sbr.rel (0) target = $region13
    $region12: #{tpu_custom_call.1} parent=1 // pred_region
      _
    $region13: #{tpu_custom_call.1} parent=1 // pred_fallthru
      _
    // Predicated region
    $region14: #{tpu_custom_call.1} parent=1 // pred_check
      _
    $region15: #{tpu_custom_call.1} parent=1 // pred_check_branch
      %38 = sbr.rel (0) target = $region17
    $region16: #{tpu_custom_call.1} parent=1 // pred_region
      %39 = dma.done [#allocation4], 512
    $region17: #{tpu_custom_call.1} parent=1 // pred_fallthru
      _
    // Predicated region
    $region18: #{tpu_custom_call.1} parent=1 // pred_check
      _
    $region19: #{tpu_custom_call.1} parent=1 // pred_check_branch
      %41 = sbr.rel (0) target = $region21
    $region20: #{tpu_custom_call.1} parent=1 // pred_region
      %42 = dma.done [#allocation7], 4096
    $region21: #{tpu_custom_call.1} parent=1 // pred_fallthru
      _
    %p43 = scmp.eq.s32.totalorder 0, 0
    // Predicated region
    $region22: #{tpu_custom_call.1} parent=1 // pred_check
      %p44 = pneg %p43
    $region23: #{tpu_custom_call.1} parent=1 // pred_check_branch
      %46 = sbr.rel (%p44) target = $region25
    $region24: #{tpu_custom_call.1} parent=1 // pred_region
      %47 = vst [vmem:[#allocation2] sm:$0xf] 0.0
    $region25: #{tpu_custom_call.1} parent=1 // pred_fallthru
      _
    %v48 = vld [vmem:[#allocation2] sm:$0xf]
    %v49 = vld [vmem:[#allocation3] sm:$0xff]
    %v50 = vld [vmem:[#allocation3 + $0x8] sm:$0xff]
    %v51 = vld [vmem:[#allocation3 + $0x10] sm:$0xff]
    %v52 = vld [vmem:[#allocation3 + $0x18] sm:$0xff]
    %v53 = vrot.slane %v49, 4
    %v54 = vadd.f32 %v49, %v53
    %v55 = vrot.slane %v54, 2
    %v56 = vadd.f32 %v54, %v55
    %v57 = vrot.slane %v56, 1
    %v58 = vadd.f32 %v56, %v57
    %v59 = vrot.slane %v50, 4
    %v60 = vadd.f32 %v50, %v59
    %v61 = vrot.slane %v60, 2
    %v62 = vadd.f32 %v60, %v61
    %v63 = vrot.slane %v62, 1
    %v64 = vadd.f32 %v62, %v63
    %v65 = vrot.slane %v51, 4
    %v66 = vadd.f32 %v51, %v65
    %v67 = vrot.slane %v66, 2
    %v68 = vadd.f32 %v66, %v67
    %v69 = vrot.slane %v68, 1
    %v70 = vadd.f32 %v68, %v69
    %v71 = vrot.slane %v52, 4
    %v72 = vadd.f32 %v52, %v71
    %v73 = vrot.slane %v72, 2
    %v74 = vadd.f32 %v72, %v73
    %v75 = vrot.slane %v74, 1
    %v76 = vadd.f32 %v74, %v75
    %v81 = vcombine.low %v58, %v64
    %v83 = vunpack.c.l.s4 1983009808
    %v84 = vunpack.c.0.s8 %v83
    %v85 = vlaneseq
    %v86 = vshrl.u32 %v85, 7
    %v87 = vsub.s32 %v84, %v86
    %v88 = vrot.slane %v81, %v87
    %v89 = vcombine.low %v70, %v76
    %v91 = vunpack.c.l.s4 1983009808
    %v92 = vunpack.c.0.s8 %v91
    %v93 = vlaneseq
    %v94 = vshrl.u32 %v93, 7
    %v95 = vsub.s32 %v92, %v94
    %v96 = vrot.slane %v89, %v95
    %vm97 = vcmask 1044484
    %v98 = vsel %vm97, %v88, %v88
    %vm99 = vcmask 1046534
    %v100 = vsel %vm99, %v88, %v98
    %v101 = vrot.slane %v96, 7
    %vm102 = vcmask 1041409
    %v103 = vsel %vm102, %v101, %v100
    %vm104 = vcmask 1043459
    %v105 = vsel %vm104, %v101, %v103
    %vm106 = vcmask 1045509
    %v107 = vsel %vm106, %v101, %v105
    %vm108 = vcmask 1047559
    %v109 = vsel %vm108, %v101, %v107
    %v111 = vadd.f32 %v48, %v109
    %112 = vst [vmem:[#allocation2] sm:$0xf] %v111
    // Predicated region
    $region26: #{tpu_custom_call.1} parent=1 // pred_check
      %p113 = pneg %p43
    $region27: #{tpu_custom_call.1} parent=1 // pred_check_branch
      %115 = sbr.rel (%p113) target = $region29
    $region28: #{tpu_custom_call.1} parent=1 // pred_region
      %v116 = vld [vmem:[#allocation2] sm:$0xf]
      %v117 = vmul.f32 %v116, 0.125
      %v118 = vld [vmem:[#allocation6] sm:$0xff]
      %v119 = vld [vmem:[#allocation6 + $0x8] sm:$0xff]
      %v120 = vld [vmem:[#allocation6 + $0x10] sm:$0xff]
      %v121 = vld [vmem:[#allocation6 + $0x18] sm:$0xff]
      %v122 = vld [vmem:[#allocation6 + $0x20] sm:$0xff]
      %v123 = vld [vmem:[#allocation6 + $0x28] sm:$0xff]
      %v124 = vld [vmem:[#allocation6 + $0x30] sm:$0xff]
      %v125 = vld [vmem:[#allocation6 + $0x38] sm:$0xff]
      %v126 = vld [vmem:[#allocation6 + $0x40] sm:$0xff]
      %v127 = vld [vmem:[#allocation6 + $0x48] sm:$0xff]
      %v128 = vld [vmem:[#allocation6 + $0x50] sm:$0xff]
      %v129 = vld [vmem:[#allocation6 + $0x58] sm:$0xff]
      %v130 = vld [vmem:[#allocation6 + $0x60] sm:$0xff]
      %v131 = vld [vmem:[#allocation6 + $0x68] sm:$0xff]
      %v132 = vld [vmem:[#allocation6 + $0x70] sm:$0xff]
      %v133 = vld [vmem:[#allocation6 + $0x78] sm:$0xff]
      %v134 = vld [vmem:[#allocation6 + $0x80] sm:$0xff]
      %v135 = vld [vmem:[#allocation6 + $0x88] sm:$0xff]
      %v136 = vld [vmem:[#allocation6 + $0x90] sm:$0xff]
      %v137 = vld [vmem:[#allocation6 + $0x98] sm:$0xff]
      %v138 = vld [vmem:[#allocation6 + $0xa0] sm:$0xff]
      %v139 = vld [vmem:[#allocation6 + $0xa8] sm:$0xff]
      %v140 = vld [vmem:[#allocation6 + $0xb0] sm:$0xff]
      %v141 = vld [vmem:[#allocation6 + $0xb8] sm:$0xff]
      %v142 = vld [vmem:[#allocation6 + $0xc0] sm:$0xff]
      %v143 = vld [vmem:[#allocation6 + $0xc8] sm:$0xff]
      %v144 = vld [vmem:[#allocation6 + $0xd0] sm:$0xff]
      %v145 = vld [vmem:[#allocation6 + $0xd8] sm:$0xff]
      %v146 = vld [vmem:[#allocation6 + $0xe0] sm:$0xff]
      %v147 = vld [vmem:[#allocation6 + $0xe8] sm:$0xff]
      %v148 = vld [vmem:[#allocation6 + $0xf0] sm:$0xff]
      %v149 = vld [vmem:[#allocation6 + $0xf8] sm:$0xff]
      %v150 = vld [vmem:[%s2] sm:$0x1]
      %v152 = vlaneseq
      %v153 = vshrl.u32 %v152, 7
      %v154 = vsub.s32 0, %v153
      %v155 = vrot.slane %v150, %v154
      %v159 = vunpack.c.l.s4 1983009808
      %v160 = vunpack.c.0.s8 %v159
      %v161 = vlaneseq
      %v162 = vshrl.u32 %v161, 7
      %v163 = vsub.s32 %v160, %v162
      %v164 = vrot.slane %v117, %v163
      %v165 = vcombine.high %v164, %v164
      %168 = vmatprep.subr.mxu0 0.0
      %169 = vmatpush1.msra.mxu0 %v118
      %170 = vmatprep.subr.mxu0 0.0
      %171 = vmatpush1.msra.mxu0 %v119
      %172 = vmatprep.subr.mxu0 0.0
      %173 = vmatpush1.msra.mxu0 %v120
      %174 = vmatprep.subr.mxu0 0.0
      %175 = vmatpush1.msra.mxu0 %v121
      %176 = vmatprep.subr.mxu0 0.0
      %177 = vmatpush1.msra.mxu0 %v122
      %178 = vmatprep.subr.mxu0 0.0
      %179 = vmatpush1.msra.mxu0 %v123
      %180 = vmatprep.subr.mxu0 0.0
      %181 = vmatpush1.msra.mxu0 %v124
      %182 = vmatprep.subr.mxu0 0.0
      %183 = vmatpush1.msra.mxu0 %v125
      %184 = vmatprep.subr.mxu0 0.0
      %185 = vmatpush1.msra.mxu0 %v126
      %186 = vmatprep.subr.mxu0 0.0
      %187 = vmatpush1.msra.mxu0 %v127
      %188 = vmatprep.subr.mxu0 0.0
      %189 = vmatpush1.msra.mxu0 %v128
      %190 = vmatprep.subr.mxu0 0.0
      %191 = vmatpush1.msra.mxu0 %v129
      %192 = vmatprep.subr.mxu0 0.0
      %193 = vmatpush1.msra.mxu0 %v130
      %194 = vmatprep.subr.mxu0 0.0
      %195 = vmatpush1.msra.mxu0 %v131
      %196 = vmatprep.subr.mxu0 0.0
      %197 = vmatpush1.msra.mxu0 %v132
      %198 = vmatprep.subr.mxu0 0.0
      %199 = vmatpush1.msra.mxu0 %v133
      %200 = vmatprep.subr.mxu0 0.0
      %201 = vmatpush1.msra.mxu0 %v134
      %202 = vmatprep.subr.mxu0 0.0
      %203 = vmatpush1.msra.mxu0 %v135
      %204 = vmatprep.subr.mxu0 0.0
      %205 = vmatpush1.msra.mxu0 %v136
      %206 = vmatprep.subr.mxu0 0.0
      %207 = vmatpush1.msra.mxu0 %v137
      %208 = vmatprep.subr.mxu0 0.0
      %209 = vmatpush1.msra.mxu0 %v138
      %210 = vmatprep.subr.mxu0 0.0
      %211 = vmatpush1.msra.mxu0 %v139
      %212 = vmatprep.subr.mxu0 0.0
      %213 = vmatpush1.msra.mxu0 %v140
      %214 = vmatprep.subr.mxu0 0.0
      %215 = vmatpush1.msra.mxu0 %v141
      %216 = vmatprep.subr.mxu0 0.0
      %217 = vmatpush1.msra.mxu0 %v142
      %218 = vmatprep.subr.mxu0 0.0
      %219 = vmatpush1.msra.mxu0 %v143
      %220 = vmatprep.subr.mxu0 0.0
      %221 = vmatpush1.msra.mxu0 %v144
      %222 = vmatprep.subr.mxu0 0.0
      %223 = vmatpush1.msra.mxu0 %v145
      %224 = vmatprep.subr.mxu0 0.0
      %225 = vmatpush1.msra.mxu0 %v146
      %226 = vmatprep.subr.mxu0 0.0
      %227 = vmatpush1.msra.mxu0 %v147
      %228 = vmatprep.subr.mxu0 0.0
      %229 = vmatpush1.msra.mxu0 %v148
      %230 = vmatprep.subr.mxu0 0.0
      %231 = vmatpush1.msra.mxu0 %v149
      %232 = vmatprep.mubr.f32.mxu0 %v165
      %233 = vmatmul.mubr.f32.gmra.mrb[0].mxu0 %v164
      %v234 = vpop.f32.mrb[0].mxu0
      %v235 = vadd.f32 %v155, %v234
      %v236 = vpop.f32.mrb[0].mxu0
      %237 = vdwg.mxu0
      %238 = vst [vmem:[#allocation8] sm:$0x3] %v235
    $region29: #{tpu_custom_call.1} parent=1 // pred_fallthru
      _
    // Predicated region
    $region30: #{tpu_custom_call.1} parent=1 // pred_check
      _
    $region31: #{tpu_custom_call.1} parent=1 // pred_check_branch
      %240 = sbr.rel (0) target = $region33
    $region32: #{tpu_custom_call.1} parent=1 // pred_region
      %s242 = ssub.s32 32, 32
      %243 = vsyncadd [#allocation5], %s242
      %s245 = sshll.u32 [#allocation8], 4
      %s246 = int_to_ptr.vmem [resolvable:$true] %s245
      %248 = dma.vmem_to_hbm [thread:$0]  %s246, 32, %s3, [#allocation5]
    $region33: #{tpu_custom_call.1} parent=1 // pred_fallthru
      _
    // Predicated region
    $region34: #{tpu_custom_call.1} parent=1 // pred_check
      _
    $region35: #{tpu_custom_call.1} parent=1 // pred_check_branch
      %250 = sbr.rel (0) target = $region37
    $region36: #{tpu_custom_call.1} parent=1 // pred_region
      %251 = dma.done [#allocation5], 32
    $region37: #{tpu_custom_call.1} parent=1 // pred_fallthru
      _
    %252 = vsyncpa [#allocation4], 1
    %253 = vsyncpa [#allocation7], 1
    %254 = vsyncpa [#allocation5], 1

</llo_original>
